<compile_context>
chip_gen: v7x
topology: tpu7x:2x2x1
jax: 0.10.0
libtpu: 0.0.40
codegen_flags: <defaults>
</compile_context>

<pallas_src>
import math

import jax
import jax.numpy as jnp
from jax.experimental import pallas as pl
from jax.experimental.pallas import tpu as pltpu


def _round_up(x, m):
    return ((x + m - 1) // m) * m


def _cdiv(a, b):
    return (a + b - 1) // b


# ----------------------------------------------------------------------------- kernels
def _linear_kernel_f32out(x_ref, w_ref, b_ref, o_ref):
    """One (tm, tn) output tile. Grid = (M, N, K) with K innermost ('arbitrary');
    the f32 output block IS the accumulator (resident across the K axis)."""
    k = pl.program_id(2)

    @pl.when(k == 0)
    def _():
        # Fold the bias into the accumulator init so the epilogue is a pure accumulate.
        o_ref[...] = jnp.broadcast_to(b_ref[...], o_ref.shape)

    # x tile (tm, tk) @ w tile (tk, tn): standard contraction -- no in-kernel
    # transpose/relayout of the weight tile (weight is presented in (K, N) layout).
    o_ref[...] += jnp.dot(x_ref[...], w_ref[...],
                          preferred_element_type=jnp.float32)


def _linear_kernel_acc(x_ref, w_ref, b_ref, o_ref, acc_ref):
    """Variant for non-f32 outputs: f32 VMEM accumulator, single cast at last K step."""
    k = pl.program_id(2)

    @pl.when(k == 0)
    def _():
        acc_ref[...] = jnp.broadcast_to(b_ref[...], acc_ref.shape)

    acc_ref[...] += jnp.dot(x_ref[...], w_ref[...],
                            preferred_element_type=jnp.float32)

    @pl.when(k == pl.num_programs(2) - 1)
    def _():
        o_ref[...] = acc_ref[...].astype(o_ref.dtype)


# ------------------------------------------------------------------------ tile / VMEM
def _chip_vmem_limit_bytes():
    """Chip-aware VMEM limit: ~3/4 of physical per-core VMEM, capped at 100 MiB.
    v5e/v6e (128 MiB) -> 96 MiB, v7x (64 MiB/TC) -> 48 MiB. v7x-safe fallback."""
    try:
        cap = int(pltpu.get_tpu_info().vmem_capacity_bytes)
    except Exception:
        cap = 64 * 1024 * 1024
    return int(min(cap * 3 // 4, 100 * 1024 * 1024))


def _choose_tiles(M, N, K, in_itemsize, out_itemsize, needs_acc, vmem_budget):
    # Minimum sublane pack: 8 for f32, 16 for bf16.
    sub = 8 * max(1, 4 // in_itemsize)

    # Large default tiles: 2*tm*tn/((tm+tn)*itemsize) must clear the HBM roofline.
    tm = min(512, _round_up(M, sub))
    tn = min(1024, _round_up(N, 128))

    # K tile: collapse the K grid axis when K is modest (fewer ~0.35us grid steps,
    # no per-step accumulator read-modify-write); otherwise 1024.
    k128 = _round_up(K, 128)
    tk = k128 if k128 <= 2048 else 1024

    # Dual-TensorCore (v7x): if M fits one tile, split N so a 'parallel' axis has
    # >= 2 blocks (keeps both TCs busy for small-M / decode shapes).
    if _cdiv(M, tm) == 1 and _cdiv(N, tn) == 1 and N > 256:
        tn = max(256, _round_up(_cdiv(N, 2), 128))

    def working_set(tm_, tn_, tk_):
        return (2 * tm_ * tk_ * in_itemsize       # double-buffered X tile
                + 2 * tk_ * tn_ * in_itemsize     # double-buffered W tile
                + 2 * tm_ * tn_ * out_itemsize    # double-buffered output tile
                + 2 * tn_ * 4                     # bias tile
                + (tm_ * tn_ * 4 if needs_acc else 0))

    for _ in range(16):
        if working_set(tm, tn, tk) <= vmem_budget:
            break
        if tk > 512:
            tk = max(512, _round_up(tk // 2, 128))
        elif tn > 512:
            tn = max(512, _round_up(tn // 2, 128))
        elif tm > 256:
            tm = max(256, _round_up(tm // 2, sub))
        else:
            break
    return tm, tn, tk


# --------------------------------------------------------------------------- wrapper
def column_parallel_linear(x, weight, bias=None, *, weight_layout="nk",
                           use_bf16_compute=False, interpret=False):
    """ColumnParallelLinear forward at world_size=1: Y = X @ W^T + b.

    x:      (..., K)
    weight: (N, K) with weight_layout="nk" (PyTorch convention, default), or
            (K, N) with weight_layout="kn" (pre-transposed once at init; preferred
            in production so no per-call relayout pass over W is needed).
    bias:   (N,) or None
    returns (..., N) in x.dtype

    Numerics note: with f32 inputs the MXU runs a slow multi-pass f32 matmul
    (especially costly on v5e). use_bf16_compute=True casts X/W to bf16 while
    keeping f32 accumulation: 2-4x MXU throughput and half the DMA bytes, at
    bf16 input-rounding accuracy. Opt-in because it changes numerics.
    """
    *lead, K = x.shape
    if weight_layout == "nk":
        N, K_w = weight.shape
        # One-time relayout to (K, N); store the parameter pre-transposed ("kn")
        # in production to make this free per forward.
        w_kn = weight.T
    elif weight_layout == "kn":
        K_w, N = weight.shape
        w_kn = weight
    else:
        raise ValueError(f"unknown weight_layout {weight_layout!r}")
    assert K_w == K, f"weight shape {weight.shape} incompatible with x (..., {K})"

    M = int(math.prod(lead)) if lead else 1
    out_dtype = x.dtype

    if bias is None:
        bias = jnp.zeros((N,), dtype=jnp.float32)
    assert bias.shape == (N,)

    x2d = x.reshape(M, K)
    compute_dtype = jnp.bfloat16 if use_bf16_compute else x2d.dtype
    if x2d.dtype != compute_dtype:
        x2d = x2d.astype(compute_dtype)
    if w_kn.dtype != compute_dtype:
        w_kn = w_kn.astype(compute_dtype)
    b2d = bias.astype(jnp.float32).reshape(1, N)

    in_itemsize = jnp.dtype(compute_dtype).itemsize
    out_itemsize = jnp.dtype(out_dtype).itemsize
    needs_acc = out_dtype != jnp.float32

    vmem_limit = _chip_vmem_limit_bytes()
    tm, tn, tk = _choose_tiles(M, N, K, in_itemsize, out_itemsize, needs_acc,
                               vmem_limit)

    # Only K needs zero-padding (reduction correctness). Ragged M/N are handled by
    # the cdiv grid: boundary blocks read unspecified padding that only lands in
    # rows/cols >= M/N, and out-of-bounds output writes are masked.
    Kp = _round_up(K, tk)
    if Kp != K:
        x2d = jnp.pad(x2d, ((0, 0), (0, Kp - K)))
        w_kn = jnp.pad(w_kn, ((0, Kp - K), (0, 0)))

    grid_m, grid_n, grid_k = _cdiv(M, tm), _cdiv(N, tn), Kp // tk
    # Invariant: the reduction (K) axis MUST stay innermost and 'arbitrary' -- the
    # bias fold at k==0 and the in-place accumulation rely on the output block being
    # resident across consecutive K steps.
    grid = (grid_m, grid_n, grid_k)

    kernel = _linear_kernel_acc if needs_acc else _linear_kernel_f32out
    scratch_shapes = [pltpu.VMEM((tm, tn), jnp.float32)] if needs_acc else []

    # Bytes reflect actual re-streaming: W is read grid_m times, X grid_n times.
    cost = pl.CostEstimate(
        flops=2 * M * N * Kp,
        bytes_accessed=(M * Kp * in_itemsize) * grid_n
        + (Kp * N * in_itemsize) * grid_m
        + M * N * out_itemsize
        + N * 4,
        transcendentals=0,
    )

    out = pl.pallas_call(
        kernel,
        out_shape=jax.ShapeDtypeStruct((M, N), out_dtype),
        grid_spec=pltpu.PrefetchScalarGridSpec(
            num_scalar_prefetch=0,
            grid=grid,
            in_specs=[
                pl.BlockSpec((tm, tk), lambda i, j, k: (i, k)),   # X tile
                pl.BlockSpec((tk, tn), lambda i, j, k: (k, j)),   # W tile, (K, N)
                pl.BlockSpec((1, tn), lambda i, j, k: (0, j)),    # bias tile
            ],
            out_specs=pl.BlockSpec((tm, tn), lambda i, j, k: (i, j)),
            scratch_shapes=scratch_shapes,
        ),
        compiler_params=pltpu.CompilerParams(
            dimension_semantics=("parallel", "parallel", "arbitrary"),
            vmem_limit_bytes=vmem_limit,
        ),
        cost_estimate=cost,
        interpret=interpret,
    )(x2d, w_kn, b2d)

    return out.reshape(*lead, N)


def init_column_parallel_linear_params(key, input_size, output_size,
                                       world_size=1, dtype=jnp.float32):
    """Deterministic parameter init matching ColumnParallelLinear.__init__.

    weight: (output_size_per_partition, input_size), xavier_normal_
    bias:   (output_size_per_partition,), zeros
    """
    assert output_size % world_size == 0
    out_pp = output_size // world_size
    # xavier_normal_: std = sqrt(2 / (fan_in + fan_out)) on the full (out, in) matrix
    std = math.sqrt(2.0 / (input_size + output_size))
    weight = std * jax.random.normal(key, (out_pp, input_size), dtype=dtype)
    bias = jnp.zeros((out_pp,), dtype=dtype)
    return weight, bias


if __name__ == "__main__":
    # Small, forward-consistent shapes: (batch, seq, hidden) input.
    B, S = 2, 8
    input_size, output_size = 128, 256   # hidden -> column-parallel projection

    key = jax.random.PRNGKey(0)
    k_x, k_w, k_x2, k_b2 = jax.random.split(key, 4)

    x = jax.random.normal(k_x, (B, S, input_size), dtype=jnp.float32)
    weight, bias = init_column_parallel_linear_params(
        k_w, input_size, output_size, world_size=1
    )
    # TODO(synk): multi-rank copy_to / gather_from tensor-parallel collectives and the
    # HPU FP8 transformer-engine path are identities / disabled at world_size=1 and
    # are not emulated here.

    # Exact f32 path, PyTorch-layout (N, K) weight.
    y = jax.block_until_ready(column_parallel_linear(x, weight, bias))
    y_ref = x @ weight.T + bias
    assert y.shape == (B, S, output_size)
    assert jnp.allclose(y, y_ref, atol=1e-4, rtol=1e-4), "f32 (N,K) path mismatch"

    # Pre-transposed (K, N) weight path (production layout: no per-call relayout).
    y_kn = jax.block_until_ready(
        column_parallel_linear(x, weight.T, bias, weight_layout="kn"))
    assert jnp.allclose(y_kn, y_ref, atol=1e-4, rtol=1e-4), "(K,N) path mismatch"

    # Ragged M / N / K exercising cdiv-grid masking and the K zero-pad
    # (M = 3*5 = 15, K = 100, N = 192), with a non-zero bias.
    in2, out2 = 100, 192
    w2, _ = init_column_parallel_linear_params(k_w, in2, out2, world_size=1)
    b2 = 0.1 * jax.random.normal(k_b2, (out2,), dtype=jnp.float32)
    x2 = jax.random.normal(k_x2, (3, 5, in2), dtype=jnp.float32)
    y2 = jax.block_until_ready(column_parallel_linear(x2, w2, b2))
    y2_ref = x2 @ w2.T + b2
    assert y2.shape == (3, 5, out2)
    assert jnp.allclose(y2, y2_ref, atol=1e-4, rtol=1e-4), "ragged path mismatch"

    # Opt-in bf16 MXU compute (f32 accumulation) -- looser tolerance by design.
    y3 = jax.block_until_ready(
        column_parallel_linear(x, weight, bias, use_bf16_compute=True))
    assert jnp.allclose(y3, y_ref, atol=3e-2, rtol=3e-2), "bf16-compute path mismatch"

    print("KERNEL_OK")
</pallas_src>

<mosaic_0001>
module attributes {stable_mosaic.version = 11 : i64} {
  func.func @_linear_kernel_f32out(%arg0: i32, %arg1: i32, %arg2: i32, %arg3: memref<16x128xf32, #tpu.memory_space<vmem>>, %arg4: memref<128x256xf32, #tpu.memory_space<vmem>>, %arg5: memref<1x256xf32, #tpu.memory_space<vmem>>, %arg6: memref<16x256xf32, #tpu.memory_space<vmem>>) attributes {dimension_semantics = [#tpu.dimension_semantics<parallel>, #tpu.dimension_semantics<parallel>, #tpu.dimension_semantics<arbitrary>], iteration_bounds = array<i64: 1, 1, 1>, scalar_prefetch = 0 : i64, scratch_operands = 0 : i64, tpu.core_type = #tpu.core_type<tc>, window_params = [{transform_indices = @transform_0, window_bounds = array<i64: 16, 128>}, {transform_indices = @transform_1, window_bounds = array<i64: 128, 256>}, {transform_indices = @transform_2, window_bounds = array<i64: 1, 256>}, {transform_indices = @transform_3, window_bounds = array<i64: 16, 256>}]} {
    %c0_i32 = arith.constant 0 : i32
    %0 = arith.cmpi eq, %arg2, %c0_i32 : i32
    %1 = arith.extui %0 : i1 to i32
    %c0_i32_0 = arith.constant 0 : i32
    %2 = arith.cmpi ne, %1, %c0_i32_0 : i32
    scf.if %2 {
      %c0_8 = arith.constant 0 : index
      %c0_9 = arith.constant 0 : index
      %9 = vector.load %arg5[%c0_8, %c0_9] : memref<1x256xf32, #tpu.memory_space<vmem>>, vector<1x256xf32>
      %10 = vector.shape_cast %9 : vector<1x256xf32> to vector<1x256xf32>
      %11 = vector.broadcast %10 : vector<1x256xf32> to vector<16x256xf32>
      %c0_10 = arith.constant 0 : index
      %c0_11 = arith.constant 0 : index
      %12 = vector.load %arg6[%c0_10, %c0_11] : memref<16x256xf32, #tpu.memory_space<vmem>>, vector<16x256xf32>
      tpu.vector_store %arg6[%c0_10, %c0_11], %11 {strides = array<i32>} : memref<16x256xf32, #tpu.memory_space<vmem>>, vector<16x256xf32>,
    } else {
    }
    %c0 = arith.constant 0 : index
    %c0_1 = arith.constant 0 : index
    %3 = vector.load %arg6[%c0, %c0_1] : memref<16x256xf32, #tpu.memory_space<vmem>>, vector<16x256xf32>
    %c0_2 = arith.constant 0 : index
    %c0_3 = arith.constant 0 : index
    %4 = vector.load %arg3[%c0_2, %c0_3] : memref<16x128xf32, #tpu.memory_space<vmem>>, vector<16x128xf32>
    %c0_4 = arith.constant 0 : index
    %c0_5 = arith.constant 0 : index
    %5 = vector.load %arg4[%c0_4, %c0_5] : memref<128x256xf32, #tpu.memory_space<vmem>>, vector<128x256xf32>
    %cst = arith.constant dense<0.000000e+00> : vector<16x256xf32>
    %6 = tpu.matmul %4, %5, %cst {dimension_numbers = #tpu.dot_dimension_numbers<[1], [0], [0], [1], [0, 0, 1, 1], [], []>} : vector<16x128xf32>, vector<128x256xf32>, vector<16x256xf32> -> vector<16x256xf32>
    %7 = arith.addf %3, %6 : vector<16x256xf32>
    %c0_6 = arith.constant 0 : index
    %c0_7 = arith.constant 0 : index
    %8 = vector.load %arg6[%c0_6, %c0_7] : memref<16x256xf32, #tpu.memory_space<vmem>>, vector<16x256xf32>
    tpu.vector_store %arg6[%c0_6, %c0_7], %7 {strides = array<i32>} : memref<16x256xf32, #tpu.memory_space<vmem>>, vector<16x256xf32>,
    return
  }
  func.func @transform_0(%arg0: i32, %arg1: i32, %arg2: i32) -> (i32, i32) {
    %c0_i32 = arith.constant 0 : i32
    return %arg0, %arg2 : i32, i32
  }
  func.func @transform_1(%arg0: i32, %arg1: i32, %arg2: i32) -> (i32, i32) {
    %c0_i32 = arith.constant 0 : i32
    return %arg2, %arg1 : i32, i32
  }
  func.func @transform_2(%arg0: i32, %arg1: i32, %arg2: i32) -> (i32, i32) {
    %c0_i32 = arith.constant 0 : i32
    %c0_i32_0 = arith.constant 0 : i32
    return %c0_i32, %arg1 : i32, i32
  }
  func.func @transform_3(%arg0: i32, %arg1: i32, %arg2: i32) -> (i32, i32) {
    %c0_i32 = arith.constant 0 : i32
    return %arg0, %arg1 : i32, i32
  }
}

</mosaic_0001>

<llo_original>
// kernel: tpu_custom_call.1
$region0: #{tpu_custom_call.1}
  #allocation0 [shape = 'u32[]', space=smem, size = 0x4, offset = 0x4, fixed_abs, tag = 'smem constant byte address 0x4 - core index']
  #allocation1 [shape = 'u32[144,128]{1,0:T(1,128)}', space=vmem, size = 0x12000, scoped, tag = 'internal scratch']
  %s0 = inlined_call_operand.hbm [shape: f32[16,128], index: 0, kind: input, shape index: {}]
  %s1 = inlined_call_operand.hbm [shape: f32[128,256], index: 1, kind: input, shape index: {}]
  %s2 = inlined_call_operand.vmem [shape: f32[1,256], index: 2, kind: input, shape index: {}]
  %s3 = inlined_call_operand.hbm [shape: f32[16,256], index: 3, kind: output, shape index: {}]
  %s4 = sld [smem:[#allocation0]]
  $region34: #{tpu_custom_call.1} parent=0
    _
  %s6 = ssub.s32 1, %s4
  %s7 = scalar_select 0, %s6, %s4
  $region1: #{tpu_custom_call.1} parent=0
    #allocation2 [shape = 'u8[8192]{0}', space=vmem, size = 0x2000, scoped, tag = 'input window, operand 0, single buffered']
    #allocation3 [shape = 's32[1]{0}', space=sflag, size = 0x4, scoped, tag = 'scoped memory for tpu_custom_call.1']
    #allocation4 [shape = 's32[1]{0}', space=sflag, size = 0x4, scoped, tag = 'scoped memory for tpu_custom_call.1']
    #allocation5 [shape = 'u8[131072]{0}', space=vmem, size = 0x20000, scoped, tag = 'input window, operand 1, single buffered']
    #allocation6 [shape = 's32[1]{0}', space=sflag, size = 0x4, scoped, tag = 'scoped memory for tpu_custom_call.1']
    #allocation7 [shape = 'u8[16384]{0}', space=vmem, size = 0x4000, scoped, tag = 'output window, operand 0, single buffered']
    %8 = vsyncpa [#allocation3], 0
    %9 = vsyncpa [#allocation6], 0
    %10 = vsyncpa [#allocation4], 0
    // Predicated region
    $region2: #{tpu_custom_call.1} parent=1 // pred_check
      _
    $region3: #{tpu_custom_call.1} parent=1 // pred_check_branch
      %12 = sbr.rel (0) target = $region5
    $region4: #{tpu_custom_call.1} parent=1 // pred_region
      %s14 = ssub.s32 256, 256
      %15 = vsyncadd [#allocation3], %s14
      %s16 = sshll.u32 [#allocation2], 4
      %s17 = int_to_ptr.vmem [resolvable:$true] %s16
      %22 = dma.hbm_to_vmem [thread:$0]  %s0, 256, %s17, [#allocation3], 128, 128, 8
    $region5: #{tpu_custom_call.1} parent=1 // pred_fallthru
      _
    // Predicated region
    $region6: #{tpu_custom_call.1} parent=1 // pred_check
      _
    $region7: #{tpu_custom_call.1} parent=1 // pred_check_branch
      %24 = sbr.rel (0) target = $region9
    $region8: #{tpu_custom_call.1} parent=1 // pred_region
      %s26 = ssub.s32 4096, 4096
      %27 = vsyncadd [#allocation6], %s26
      %s28 = sshll.u32 [#allocation5], 4
      %s29 = int_to_ptr.vmem [resolvable:$true] %s28
      %34 = dma.hbm_to_vmem [thread:$0]  %s1, 4096, %s29, [#allocation6], 256, 256, 16
    $region9: #{tpu_custom_call.1} parent=1 // pred_fallthru
      _
    // Predicated region
    $region10: #{tpu_custom_call.1} parent=1 // pred_check
      _
    $region11: #{tpu_custom_call.1} parent=1 // pred_check_branch
      %36 = sbr.rel (0) target = $region13
    $region12: #{tpu_custom_call.1} parent=1 // pred_region
      _
    $region13: #{tpu_custom_call.1} parent=1 // pred_fallthru
      _
    // Predicated region
    $region14: #{tpu_custom_call.1} parent=1 // pred_check
      _
    $region15: #{tpu_custom_call.1} parent=1 // pred_check_branch
      %38 = sbr.rel (0) target = $region17
    $region16: #{tpu_custom_call.1} parent=1 // pred_region
      %39 = dma.done [#allocation3], 256
    $region17: #{tpu_custom_call.1} parent=1 // pred_fallthru
      _
    // Predicated region
    $region18: #{tpu_custom_call.1} parent=1 // pred_check
      _
    $region19: #{tpu_custom_call.1} parent=1 // pred_check_branch
      %41 = sbr.rel (0) target = $region21
    $region20: #{tpu_custom_call.1} parent=1 // pred_region
      %42 = dma.done [#allocation6], 4096
    $region21: #{tpu_custom_call.1} parent=1 // pred_fallthru
      _
    %p43 = scmp.eq.s32.totalorder 0, 0
    // Predicated region
    $region22: #{tpu_custom_call.1} parent=1 // pred_check
      %p44 = pneg %p43
    $region23: #{tpu_custom_call.1} parent=1 // pred_check_branch
      %46 = sbr.rel (%p44) target = $region25
    $region24: #{tpu_custom_call.1} parent=1 // pred_region
      %v47 = vld [vmem:[%s2] sm:$0x3]
      %v49 = vlaneseq
      %v50 = vshrl.u32 %v49, 7
      %v51 = vsub.s32 0, %v50
      %v52 = vrot.slane %v47, %v51
      %v53 = vlaneseq
      %v54 = vshrl.u32 %v53, 7
      %v55 = vsub.s32 1, %v54
      %v56 = vrot.slane %v47, %v55
      %59 = vst [vmem:[#allocation7] sm:$0xff] %v52
      %60 = vst [vmem:[#allocation7 + $0x8] sm:$0xff] %v56
      %61 = vst [vmem:[#allocation7 + $0x10] sm:$0xff] %v52
      %62 = vst [vmem:[#allocation7 + $0x18] sm:$0xff] %v56
    $region25: #{tpu_custom_call.1} parent=1 // pred_fallthru
      _
    %v63 = vld [vmem:[#allocation7] sm:$0xff]
    %v64 = vld [vmem:[#allocation7 + $0x8] sm:$0xff]
    %v65 = vld [vmem:[#allocation7 + $0x10] sm:$0xff]
    %v66 = vld [vmem:[#allocation7 + $0x18] sm:$0xff]
    %v67 = vld [vmem:[#allocation2] sm:$0xff]
    %v68 = vld [vmem:[#allocation2 + $0x8] sm:$0xff]
    %v69 = vld [vmem:[#allocation5] sm:$0xff]
    %v70 = vld [vmem:[#allocation5 + $0x8] sm:$0xff]
    %v71 = vld [vmem:[#allocation5 + $0x10] sm:$0xff]
    %v72 = vld [vmem:[#allocation5 + $0x18] sm:$0xff]
    %v73 = vld [vmem:[#allocation5 + $0x20] sm:$0xff]
    %v74 = vld [vmem:[#allocation5 + $0x28] sm:$0xff]
    %v75 = vld [vmem:[#allocation5 + $0x30] sm:$0xff]
    %v76 = vld [vmem:[#allocation5 + $0x38] sm:$0xff]
    %v77 = vld [vmem:[#allocation5 + $0x40] sm:$0xff]
    %v78 = vld [vmem:[#allocation5 + $0x48] sm:$0xff]
    %v79 = vld [vmem:[#allocation5 + $0x50] sm:$0xff]
    %v80 = vld [vmem:[#allocation5 + $0x58] sm:$0xff]
    %v81 = vld [vmem:[#allocation5 + $0x60] sm:$0xff]
    %v82 = vld [vmem:[#allocation5 + $0x68] sm:$0xff]
    %v83 = vld [vmem:[#allocation5 + $0x70] sm:$0xff]
    %v84 = vld [vmem:[#allocation5 + $0x78] sm:$0xff]
    %v85 = vld [vmem:[#allocation5 + $0x80] sm:$0xff]
    %v86 = vld [vmem:[#allocation5 + $0x88] sm:$0xff]
    %v87 = vld [vmem:[#allocation5 + $0x90] sm:$0xff]
    %v88 = vld [vmem:[#allocation5 + $0x98] sm:$0xff]
    %v89 = vld [vmem:[#allocation5 + $0xa0] sm:$0xff]
    %v90 = vld [vmem:[#allocation5 + $0xa8] sm:$0xff]
    %v91 = vld [vmem:[#allocation5 + $0xb0] sm:$0xff]
    %v92 = vld [vmem:[#allocation5 + $0xb8] sm:$0xff]
    %v93 = vld [vmem:[#allocation5 + $0xc0] sm:$0xff]
    %v94 = vld [vmem:[#allocation5 + $0xc8] sm:$0xff]
    %v95 = vld [vmem:[#allocation5 + $0xd0] sm:$0xff]
    %v96 = vld [vmem:[#allocation5 + $0xd8] sm:$0xff]
    %v97 = vld [vmem:[#allocation5 + $0xe0] sm:$0xff]
    %v98 = vld [vmem:[#allocation5 + $0xe8] sm:$0xff]
    %v99 = vld [vmem:[#allocation5 + $0xf0] sm:$0xff]
    %v100 = vld [vmem:[#allocation5 + $0xf8] sm:$0xff]
    %101 = vmatprep.subr.mxu0 %v70
    %102 = vmatpush1.msra.mxu0 %v69
    %103 = vmatprep.subr.mxu0 %v72
    %104 = vmatpush1.msra.mxu0 %v71
    %105 = vmatprep.subr.mxu0 %v74
    %106 = vmatpush1.msra.mxu0 %v73
    %107 = vmatprep.subr.mxu0 %v76
    %108 = vmatpush1.msra.mxu0 %v75
    %109 = vmatprep.subr.mxu0 %v78
    %110 = vmatpush1.msra.mxu0 %v77
    %111 = vmatprep.subr.mxu0 %v80
    %112 = vmatpush1.msra.mxu0 %v79
    %113 = vmatprep.subr.mxu0 %v82
    %114 = vmatpush1.msra.mxu0 %v81
    %115 = vmatprep.subr.mxu0 %v84
    %116 = vmatpush1.msra.mxu0 %v83
    %117 = vmatprep.subr.mxu0 %v86
    %118 = vmatpush1.msra.mxu0 %v85
    %119 = vmatprep.subr.mxu0 %v88
    %120 = vmatpush1.msra.mxu0 %v87
    %121 = vmatprep.subr.mxu0 %v90
    %122 = vmatpush1.msra.mxu0 %v89
    %123 = vmatprep.subr.mxu0 %v92
    %124 = vmatpush1.msra.mxu0 %v91
    %125 = vmatprep.subr.mxu0 %v94
    %126 = vmatpush1.msra.mxu0 %v93
    %127 = vmatprep.subr.mxu0 %v96
    %128 = vmatpush1.msra.mxu0 %v95
    %129 = vmatprep.subr.mxu0 %v98
    %130 = vmatpush1.msra.mxu0 %v97
    %131 = vmatprep.subr.mxu0 %v100
    %132 = vmatpush1.msra.mxu0 %v99
    %133 = vmatprep.subr.mxu0 0.0
    %134 = vmatpush1.msra.mxu0 0.0
    %135 = vmatprep.subr.mxu0 0.0
    %136 = vmatpush1.msra.mxu0 0.0
    %137 = vmatprep.subr.mxu0 0.0
    %138 = vmatpush1.msra.mxu0 0.0
    %139 = vmatprep.subr.mxu0 0.0
    %140 = vmatpush1.msra.mxu0 0.0
    %141 = vmatprep.subr.mxu0 0.0
    %142 = vmatpush1.msra.mxu0 0.0
    %143 = vmatprep.subr.mxu0 0.0
    %144 = vmatpush1.msra.mxu0 0.0
    %145 = vmatprep.subr.mxu0 0.0
    %146 = vmatpush1.msra.mxu0 0.0
    %147 = vmatprep.subr.mxu0 0.0
    %148 = vmatpush1.msra.mxu0 0.0
    %149 = vmatprep.subr.mxu0 0.0
    %150 = vmatpush1.msra.mxu0 0.0
    %151 = vmatprep.subr.mxu0 0.0
    %152 = vmatpush1.msra.mxu0 0.0
    %153 = vmatprep.subr.mxu0 0.0
    %154 = vmatpush1.msra.mxu0 0.0
    %155 = vmatprep.subr.mxu0 0.0
    %156 = vmatpush1.msra.mxu0 0.0
    %157 = vmatprep.subr.mxu0 0.0
    %158 = vmatpush1.msra.mxu0 0.0
    %159 = vmatprep.subr.mxu0 0.0
    %160 = vmatpush1.msra.mxu0 0.0
    %161 = vmatprep.subr.mxu0 0.0
    %162 = vmatpush1.msra.mxu0 0.0
    %163 = vmatprep.subr.mxu0 0.0
    %164 = vmatpush1.msra.mxu0 0.0
    %165 = vmatprep.mubr.f32.mxu0 0.0
    %166 = vmatmul.mubr.f32.gmra.mrb[0].mxu0 %v67
    %v167 = vpop.f32.mrb[0].mxu0
    %v168 = vadd.f32 0.0, %v167
    %v169 = vpop.f32.mrb[0].mxu0
    %v170 = vadd.f32 0.0, %v169
    %171 = vmatprep.mubr.f32.mxu0 0.0
    %172 = vmatmul.mubr.f32.gmra.mrb[0].mxu0 %v68
    %v173 = vpop.f32.mrb[0].mxu0
    %v174 = vadd.f32 0.0, %v173
    %v175 = vpop.f32.mrb[0].mxu0
    %v176 = vadd.f32 0.0, %v175
    %177 = vdwg.mxu0
    %v178 = vadd.f32 %v63, %v168
    %v179 = vadd.f32 %v64, %v170
    %v180 = vadd.f32 %v65, %v174
    %v181 = vadd.f32 %v66, %v176
    %182 = vst [vmem:[#allocation7] sm:$0xff] %v178
    %183 = vst [vmem:[#allocation7 + $0x8] sm:$0xff] %v179
    %184 = vst [vmem:[#allocation7 + $0x10] sm:$0xff] %v180
    %185 = vst [vmem:[#allocation7 + $0x18] sm:$0xff] %v181
    // Predicated region
    $region26: #{tpu_custom_call.1} parent=1 // pred_check
      _
    $region27: #{tpu_custom_call.1} parent=1 // pred_check_branch
      %187 = sbr.rel (0) target = $region29
    $region28: #{tpu_custom_call.1} parent=1 // pred_region
      %s189 = ssub.s32 512, 512
      %190 = vsyncadd [#allocation4], %s189
      %s191 = sshll.u32 [#allocation7], 4
      %s192 = int_to_ptr.vmem [resolvable:$true] %s191
      %197 = dma.vmem_to_hbm [thread:$0]  %s192, 512, %s3, [#allocation4], 256, 256, 16
    $region29: #{tpu_custom_call.1} parent=1 // pred_fallthru
      _
    // Predicated region
    $region30: #{tpu_custom_call.1} parent=1 // pred_check
      _
    $region31: #{tpu_custom_call.1} parent=1 // pred_check_branch
      %199 = sbr.rel (0) target = $region33
    $region32: #{tpu_custom_call.1} parent=1 // pred_region
      %200 = dma.done [#allocation4], 512
    $region33: #{tpu_custom_call.1} parent=1 // pred_fallthru
      _
    %201 = vsyncpa [#allocation3], 1
    %202 = vsyncpa [#allocation6], 1
    %203 = vsyncpa [#allocation4], 1

</llo_original>
